<compile_context>
chip_gen: v5e
topology: v5e:2x2
jax: 0.10.0
libtpu: 0.0.40
codegen_flags: <defaults>
</compile_context>

<pallas_src>
import functools

import jax
import jax.numpy as jnp
import numpy as np
from jax.experimental import pallas as pl
from jax.experimental.pallas import tpu as pltpu

HIDDEN = 32
FC_HIDDEN = 128


def _rnn_fc_kernel(x_ref, h_init_ref, w_rnn_ref, fc_ref, outs_ref, hstate_ref):
    TB, _ = x_ref.shape
    B = h_init_ref.shape[1]
    T = TB // B

    # --- unpack parameters (one-time prologue work, all static, tile-aligned slices) ---
    wih0 = w_rnn_ref[0]                                  # (32, 32); rows >= input_size are 0
    whh0 = w_rnn_ref[1]                                  # (32, 32)
    wih1 = w_rnn_ref[2]                                  # (32, 32)
    whh1 = w_rnn_ref[3]                                  # (32, 32)

    fcp = fc_ref[...]                                    # (37, 128) packed FC/bias params
    wfc1 = fcp[0:HIDDEN, :]                              # (32, 128)
    bfc1 = fcp[HIDDEN:HIDDEN + 1, :]                     # (1, 128)
    wfc2r = fcp[HIDDEN + 1:HIDDEN + 2, :]                # (1, 128)  fc2 weight as a row
    b0 = fcp[HIDDEN + 2:HIDDEN + 3, 0:HIDDEN]            # (1, 32)   b_ih0 + b_hh0
    b1r = fcp[HIDDEN + 3:HIDDEN + 4, 0:HIDDEN]           # (1, 32)   b_ih1 + b_hh1
    bfc2 = fcp[HIDDEN + 4:HIDDEN + 5, 0:1]               # (1, 1)

    # --- layer-0 input projection hoisted off the serial chain: ONE batched MXU matmul ---
    pre0 = jnp.dot(x_ref[...], wih0, preferred_element_type=jnp.float32) + b0   # (T*B, 32)
    # Hoist the bias broadcast out of the time loop (broadcast_in_dim is not CSE'd).
    b1 = jnp.broadcast_to(b1r, (B, HIDDEN))

    h0 = h_init_ref[0]                                   # (B, 32)
    h1 = h_init_ref[1]                                   # (B, 32)

    # Sequential recurrence, fully unrolled (T is small & static -> static slices only).
    # Serial critical path per step: one (B,32)@(32,32) MXU op + tanh per layer; the
    # h0@Wih1 dot does not depend on h1 and overlaps with the h1@Whh1 push.
    h1_steps = []
    for t in range(T):
        h0 = jnp.tanh(pre0[t * B:(t + 1) * B, :]
                      + jnp.dot(h0, whh0, preferred_element_type=jnp.float32))
        h1 = jnp.tanh(jnp.dot(h0, wih1, preferred_element_type=jnp.float32)
                      + jnp.dot(h1, whh1, preferred_element_type=jnp.float32)
                      + b1)
        h1_steps.append(h1)                              # stays in vregs; no store in the loop

    hstate_ref[0] = h0
    hstate_ref[1] = h1

    # --- non-recurrent FC head, batched over all T*B rows (off the serial path) ---
    # TODO(synk): nn.Dropout(0.5) treated as identity (eval mode); train-mode dropout is
    # not reproduced here.
    h1_all = jnp.concatenate(h1_steps, axis=0)           # (T*B, 32), one-time XLU work
    fc1 = jnp.maximum(
        jnp.dot(h1_all, wfc1, preferred_element_type=jnp.float32) + bfc1, 0.0)  # (T*B, 128)
    # (T*B,128)@(128,1) as VPU multiply + lane reduction; single output writeback.
    outs_ref[...] = jnp.sum(fc1 * wfc2r, axis=-1, keepdims=True) + bfc2          # (T*B, 1)


def _pack_params(params, input_size):
    """Pack the 10 small parameter tensors into 2 arrays (cuts prologue DMA count)."""
    assert input_size <= HIDDEN
    wih0_pad = jnp.zeros((HIDDEN, HIDDEN), jnp.float32).at[:input_size, :].set(params["wih0"])
    w_rnn = jnp.stack([wih0_pad, params["whh0"], params["wih1"], params["whh1"]], axis=0)

    def row128(v):
        v = v.reshape(1, -1)
        return jnp.pad(v, ((0, 0), (0, FC_HIDDEN - v.shape[1])))

    fc_pack = jnp.concatenate([
        params["wfc1"],                           # rows 0..31
        params["bfc1"].reshape(1, FC_HIDDEN),     # row 32
        params["wfc2"].reshape(1, FC_HIDDEN),     # row 33
        row128(params["b0"]),                     # row 34 (lanes 0:32)
        row128(params["b1"]),                     # row 35 (lanes 0:32)
        row128(params["bfc2"]),                   # row 36 (lane 0)
    ], axis=0)                                    # (37, 128)
    return w_rnn, fc_pack


def rnn_forward(x, h_state, params):
    """x: (B, T, I) float32, h_state: (2, B, 32) float32 -> ((B, T, 1), (2, B, 32))."""
    B, T, I = x.shape
    # Time-major, flattened (row index = t*B + b), zero-padded to 32 input features.
    x_flat = jnp.transpose(x, (1, 0, 2)).reshape(T * B, I)
    x_flat = jnp.pad(x_flat, ((0, 0), (0, HIDDEN - I)))

    w_rnn, fc_pack = _pack_params(params, I)

    def full_spec(shape):
        n = len(shape)
        return pl.BlockSpec(shape, lambda i, _n=n: (0,) * _n)

    outs_flat, h_out = pl.pallas_call(
        _rnn_fc_kernel,
        out_shape=(
            jax.ShapeDtypeStruct((T * B, 1), jnp.float32),
            jax.ShapeDtypeStruct((2, B, HIDDEN), jnp.float32),
        ),
        grid_spec=pltpu.PrefetchScalarGridSpec(
            num_scalar_prefetch=0,
            grid=(1,),                                   # single grid step; loop is in-kernel
            in_specs=[
                full_spec((T * B, HIDDEN)),              # x (time-major, padded to 32 feats)
                full_spec((2, B, HIDDEN)),               # initial hidden state
                full_spec((4, HIDDEN, HIDDEN)),          # packed RNN weights
                full_spec((HIDDEN + 5, FC_HIDDEN)),      # packed FC weights + all biases
            ],
            out_specs=[
                full_spec((T * B, 1)),                   # per-(t,b) scalar outputs
                full_spec((2, B, HIDDEN)),               # final hidden state
            ],
        ),
        compiler_params=pltpu.CompilerParams(
            dimension_semantics=("arbitrary",)),         # single sequential grid step
    )(x_flat, h_state, w_rnn, fc_pack)

    outs = jnp.transpose(outs_flat.reshape(T, B, 1), (1, 0, 2))       # (B, T, 1)
    return outs, h_out


def init_params(input_size, key):
    """Deterministic parameter init mirroring the PyTorch module's shapes.

    Weights are stored pre-transposed (in_features, out_features) so the kernel does
    plain x @ W; the two RNN bias vectors per layer are folded into one.
    """
    ks = jax.random.split(key, 12)
    k_rnn = 1.0 / np.sqrt(HIDDEN)

    def u(k, shape, bound):
        return jax.random.uniform(k, shape, jnp.float32, -bound, bound)

    params = {
        # layer 0
        "wih0": u(ks[0], (input_size, HIDDEN), k_rnn),
        "whh0": u(ks[1], (HIDDEN, HIDDEN), k_rnn),
        "b0":   u(ks[2], (1, HIDDEN), k_rnn) + u(ks[3], (1, HIDDEN), k_rnn),
        # layer 1
        "wih1": u(ks[4], (HIDDEN, HIDDEN), k_rnn),
        "whh1": u(ks[5], (HIDDEN, HIDDEN), k_rnn),
        "b1":   u(ks[6], (1, HIDDEN), k_rnn) + u(ks[7], (1, HIDDEN), k_rnn),
        # fc head
        "wfc1": u(ks[8], (HIDDEN, FC_HIDDEN), 1.0 / np.sqrt(HIDDEN)),
        "bfc1": u(ks[9], (1, FC_HIDDEN), 1.0 / np.sqrt(HIDDEN)),
        "wfc2": u(ks[10], (FC_HIDDEN, 1), 1.0 / np.sqrt(FC_HIDDEN)),
        "bfc2": u(ks[11], (1, 1), 1.0 / np.sqrt(FC_HIDDEN)),
    }
    return params


def rnn_forward_ref(x, h_state, params):
    """Pure-JAX reference of the same forward pass (dropout = identity)."""
    B, T, I = x.shape
    h0 = h_state[0]
    h1 = h_state[1]
    outs = []
    for t in range(T):
        x_t = x[:, t, :]
        h0 = jnp.tanh(x_t @ params["wih0"] + h0 @ params["whh0"] + params["b0"])
        h1 = jnp.tanh(h0 @ params["wih1"] + h1 @ params["whh1"] + params["b1"])
        fc1 = jnp.maximum(h1 @ params["wfc1"] + params["bfc1"], 0.0)
        outs.append(fc1 @ params["wfc2"] + params["bfc2"])
    return jnp.stack(outs, axis=1), jnp.stack([h0, h1], axis=0)


if __name__ == "__main__":
    B, T, INPUT_SIZE = 2, 8, 4

    key = jax.random.PRNGKey(0)
    k_x, k_h, k_p = jax.random.split(key, 3)

    x = jax.random.normal(k_x, (B, T, INPUT_SIZE), dtype=jnp.float32)
    h_state = jax.random.normal(k_h, (2, B, HIDDEN), dtype=jnp.float32)
    params = init_params(INPUT_SIZE, k_p)

    outs, h_out = jax.jit(functools.partial(rnn_forward, params=params))(x, h_state)
    jax.block_until_ready((outs, h_out))

    outs_ref, h_out_ref = rnn_forward_ref(x, h_state, params)
    np.testing.assert_allclose(np.asarray(outs), np.asarray(outs_ref), rtol=1e-5, atol=1e-5)
    np.testing.assert_allclose(np.asarray(h_out), np.asarray(h_out_ref), rtol=1e-5, atol=1e-5)

    assert outs.shape == (B, T, 1) and h_out.shape == (2, B, HIDDEN)
    print("KERNEL_OK")
</pallas_src>

<mosaic_0001>
module attributes {stable_mosaic.version = 11 : i64} {
  func.func @_rnn_fc_kernel(%arg0: i32, %arg1: memref<16x32xf32, #tpu.memory_space<vmem>>, %arg2: memref<2x2x32xf32, #tpu.memory_space<vmem>>, %arg3: memref<4x32x32xf32, #tpu.memory_space<vmem>>, %arg4: memref<37x128xf32, #tpu.memory_space<vmem>>, %arg5: memref<16x1xf32, #tpu.memory_space<vmem>>, %arg6: memref<2x2x32xf32, #tpu.memory_space<vmem>>) attributes {dimension_semantics = [#tpu.dimension_semantics<arbitrary>], iteration_bounds = array<i64: 1>, scalar_prefetch = 0 : i64, scratch_operands = 0 : i64, tpu.core_type = #tpu.core_type<tc>, window_params = [{pipeline_mode = #tpu.pipeline_mode<synchronous>, transform_indices = @transform_0, window_bounds = array<i64: 16, 32>}, {pipeline_mode = #tpu.pipeline_mode<synchronous>, transform_indices = @transform_1, window_bounds = array<i64: 2, 2, 32>}, {pipeline_mode = #tpu.pipeline_mode<synchronous>, transform_indices = @transform_2, window_bounds = array<i64: 4, 32, 32>}, {pipeline_mode = #tpu.pipeline_mode<synchronous>, transform_indices = @transform_3, window_bounds = array<i64: 37, 128>}, {pipeline_mode = #tpu.pipeline_mode<synchronous>, transform_indices = @transform_4, window_bounds = array<i64: 16, 1>}, {pipeline_mode = #tpu.pipeline_mode<synchronous>, transform_indices = @transform_5, window_bounds = array<i64: 2, 2, 32>}]} {
    %c0 = arith.constant 0 : index
    %c0_0 = arith.constant 0 : index
    %c0_1 = arith.constant 0 : index
    %0 = vector.load %arg3[%c0, %c0_0, %c0_1] : memref<4x32x32xf32, #tpu.memory_space<vmem>>, vector<1x32x32xf32>
    %1 = vector.shape_cast %0 : vector<1x32x32xf32> to vector<32x32xf32>
    %c1 = arith.constant 1 : index
    %c0_2 = arith.constant 0 : index
    %c0_3 = arith.constant 0 : index
    %2 = vector.load %arg3[%c1, %c0_2, %c0_3] : memref<4x32x32xf32, #tpu.memory_space<vmem>>, vector<1x32x32xf32>
    %3 = vector.shape_cast %2 : vector<1x32x32xf32> to vector<32x32xf32>
    %c2 = arith.constant 2 : index
    %c0_4 = arith.constant 0 : index
    %c0_5 = arith.constant 0 : index
    %4 = vector.load %arg3[%c2, %c0_4, %c0_5] : memref<4x32x32xf32, #tpu.memory_space<vmem>>, vector<1x32x32xf32>
    %5 = vector.shape_cast %4 : vector<1x32x32xf32> to vector<32x32xf32>
    %c3 = arith.constant 3 : index
    %c0_6 = arith.constant 0 : index
    %c0_7 = arith.constant 0 : index
    %6 = vector.load %arg3[%c3, %c0_6, %c0_7] : memref<4x32x32xf32, #tpu.memory_space<vmem>>, vector<1x32x32xf32>
    %7 = vector.shape_cast %6 : vector<1x32x32xf32> to vector<32x32xf32>
    %c0_8 = arith.constant 0 : index
    %c0_9 = arith.constant 0 : index
    %8 = vector.load %arg4[%c0_8, %c0_9] : memref<37x128xf32, #tpu.memory_space<vmem>>, vector<37x128xf32>
    %9 = vector.extract_strided_slice %8 {offsets = [0, 0], sizes = [32, 128], strides = [1, 1]} : vector<37x128xf32> to vector<32x128xf32>
    %10 = vector.extract_strided_slice %8 {offsets = [32, 0], sizes = [1, 128], strides = [1, 1]} : vector<37x128xf32> to vector<1x128xf32>
    %11 = vector.extract_strided_slice %8 {offsets = [33, 0], sizes = [1, 128], strides = [1, 1]} : vector<37x128xf32> to vector<1x128xf32>
    %12 = vector.extract_strided_slice %8 {offsets = [34, 0], sizes = [1, 32], strides = [1, 1]} : vector<37x128xf32> to vector<1x32xf32>
    %13 = vector.extract_strided_slice %8 {offsets = [35, 0], sizes = [1, 32], strides = [1, 1]} : vector<37x128xf32> to vector<1x32xf32>
    %14 = vector.extract_strided_slice %8 {offsets = [36, 0], sizes = [1, 1], strides = [1, 1]} : vector<37x128xf32> to vector<1x1xf32>
    %c0_10 = arith.constant 0 : index
    %c0_11 = arith.constant 0 : index
    %15 = vector.load %arg1[%c0_10, %c0_11] : memref<16x32xf32, #tpu.memory_space<vmem>>, vector<16x32xf32>
    %cst = arith.constant dense<0.000000e+00> : vector<16x32xf32>
    %16 = tpu.matmul %15, %1, %cst {dimension_numbers = #tpu.dot_dimension_numbers<[1], [0], [0], [1], [0, 0, 1, 1], [], []>} : vector<16x32xf32>, vector<32x32xf32>, vector<16x32xf32> -> vector<16x32xf32>
    %17 = vector.broadcast %12 : vector<1x32xf32> to vector<16x32xf32>
    %18 = arith.addf %16, %17 : vector<16x32xf32>
    %19 = vector.shape_cast %13 : vector<1x32xf32> to vector<1x32xf32>
    %20 = vector.broadcast %19 : vector<1x32xf32> to vector<2x32xf32>
    %c0_12 = arith.constant 0 : index
    %c0_13 = arith.constant 0 : index
    %c0_14 = arith.constant 0 : index
    %21 = vector.load %arg2[%c0_12, %c0_13, %c0_14] : memref<2x2x32xf32, #tpu.memory_space<vmem>>, vector<1x2x32xf32>
    %22 = vector.shape_cast %21 : vector<1x2x32xf32> to vector<2x32xf32>
    %c1_15 = arith.constant 1 : index
    %c0_16 = arith.constant 0 : index
    %c0_17 = arith.constant 0 : index
    %23 = vector.load %arg2[%c1_15, %c0_16, %c0_17] : memref<2x2x32xf32, #tpu.memory_space<vmem>>, vector<1x2x32xf32>
    %24 = vector.shape_cast %23 : vector<1x2x32xf32> to vector<2x32xf32>
    %25 = vector.extract_strided_slice %18 {offsets = [0, 0], sizes = [2, 32], strides = [1, 1]} : vector<16x32xf32> to vector<2x32xf32>
    %cst_18 = arith.constant dense<0.000000e+00> : vector<2x32xf32>
    %26 = tpu.matmul %22, %3, %cst_18 {dimension_numbers = #tpu.dot_dimension_numbers<[1], [0], [0], [1], [0, 0, 1, 1], [], []>} : vector<2x32xf32>, vector<32x32xf32>, vector<2x32xf32> -> vector<2x32xf32>
    %27 = arith.addf %25, %26 : vector<2x32xf32>
    %28 = math.tanh %27 : vector<2x32xf32>
    %cst_19 = arith.constant dense<0.000000e+00> : vector<2x32xf32>
    %29 = tpu.matmul %28, %5, %cst_19 {dimension_numbers = #tpu.dot_dimension_numbers<[1], [0], [0], [1], [0, 0, 1, 1], [], []>} : vector<2x32xf32>, vector<32x32xf32>, vector<2x32xf32> -> vector<2x32xf32>
    %cst_20 = arith.constant dense<0.000000e+00> : vector<2x32xf32>
    %30 = tpu.matmul %24, %7, %cst_20 {dimension_numbers = #tpu.dot_dimension_numbers<[1], [0], [0], [1], [0, 0, 1, 1], [], []>} : vector<2x32xf32>, vector<32x32xf32>, vector<2x32xf32> -> vector<2x32xf32>
    %31 = arith.addf %29, %30 : vector<2x32xf32>
    %32 = arith.addf %31, %20 : vector<2x32xf32>
    %33 = math.tanh %32 : vector<2x32xf32>
    %34 = vector.extract_strided_slice %18 {offsets = [2, 0], sizes = [2, 32], strides = [1, 1]} : vector<16x32xf32> to vector<2x32xf32>
    %cst_21 = arith.constant dense<0.000000e+00> : vector<2x32xf32>
    %35 = tpu.matmul %28, %3, %cst_21 {dimension_numbers = #tpu.dot_dimension_numbers<[1], [0], [0], [1], [0, 0, 1, 1], [], []>} : vector<2x32xf32>, vector<32x32xf32>, vector<2x32xf32> -> vector<2x32xf32>
    %36 = arith.addf %34, %35 : vector<2x32xf32>
    %37 = math.tanh %36 : vector<2x32xf32>
    %cst_22 = arith.constant dense<0.000000e+00> : vector<2x32xf32>
    %38 = tpu.matmul %37, %5, %cst_22 {dimension_numbers = #tpu.dot_dimension_numbers<[1], [0], [0], [1], [0, 0, 1, 1], [], []>} : vector<2x32xf32>, vector<32x32xf32>, vector<2x32xf32> -> vector<2x32xf32>
    %cst_23 = arith.constant dense<0.000000e+00> : vector<2x32xf32>
    %39 = tpu.matmul %33, %7, %cst_23 {dimension_numbers = #tpu.dot_dimension_numbers<[1], [0], [0], [1], [0, 0, 1, 1], [], []>} : vector<2x32xf32>, vector<32x32xf32>, vector<2x32xf32> -> vector<2x32xf32>
    %40 = arith.addf %38, %39 : vector<2x32xf32>
    %41 = arith.addf %40, %20 : vector<2x32xf32>
    %42 = math.tanh %41 : vector<2x32xf32>
    %43 = vector.extract_strided_slice %18 {offsets = [4, 0], sizes = [2, 32], strides = [1, 1]} : vector<16x32xf32> to vector<2x32xf32>
    %cst_24 = arith.constant dense<0.000000e+00> : vector<2x32xf32>
    %44 = tpu.matmul %37, %3, %cst_24 {dimension_numbers = #tpu.dot_dimension_numbers<[1], [0], [0], [1], [0, 0, 1, 1], [], []>} : vector<2x32xf32>, vector<32x32xf32>, vector<2x32xf32> -> vector<2x32xf32>
    %45 = arith.addf %43, %44 : vector<2x32xf32>
    %46 = math.tanh %45 : vector<2x32xf32>
    %cst_25 = arith.constant dense<0.000000e+00> : vector<2x32xf32>
    %47 = tpu.matmul %46, %5, %cst_25 {dimension_numbers = #tpu.dot_dimension_numbers<[1], [0], [0], [1], [0, 0, 1, 1], [], []>} : vector<2x32xf32>, vector<32x32xf32>, vector<2x32xf32> -> vector<2x32xf32>
    %cst_26 = arith.constant dense<0.000000e+00> : vector<2x32xf32>
    %48 = tpu.matmul %42, %7, %cst_26 {dimension_numbers = #tpu.dot_dimension_numbers<[1], [0], [0], [1], [0, 0, 1, 1], [], []>} : vector<2x32xf32>, vector<32x32xf32>, vector<2x32xf32> -> vector<2x32xf32>
    %49 = arith.addf %47, %48 : vector<2x32xf32>
    %50 = arith.addf %49, %20 : vector<2x32xf32>
    %51 = math.tanh %50 : vector<2x32xf32>
    %52 = vector.extract_strided_slice %18 {offsets = [6, 0], sizes = [2, 32], strides = [1, 1]} : vector<16x32xf32> to vector<2x32xf32>
    %cst_27 = arith.constant dense<0.000000e+00> : vector<2x32xf32>
    %53 = tpu.matmul %46, %3, %cst_27 {dimension_numbers = #tpu.dot_dimension_numbers<[1], [0], [0], [1], [0, 0, 1, 1], [], []>} : vector<2x32xf32>, vector<32x32xf32>, vector<2x32xf32> -> vector<2x32xf32>
    %54 = arith.addf %52, %53 : vector<2x32xf32>
    %55 = math.tanh %54 : vector<2x32xf32>
    %cst_28 = arith.constant dense<0.000000e+00> : vector<2x32xf32>
    %56 = tpu.matmul %55, %5, %cst_28 {dimension_numbers = #tpu.dot_dimension_numbers<[1], [0], [0], [1], [0, 0, 1, 1], [], []>} : vector<2x32xf32>, vector<32x32xf32>, vector<2x32xf32> -> vector<2x32xf32>
    %cst_29 = arith.constant dense<0.000000e+00> : vector<2x32xf32>
    %57 = tpu.matmul %51, %7, %cst_29 {dimension_numbers = #tpu.dot_dimension_numbers<[1], [0], [0], [1], [0, 0, 1, 1], [], []>} : vector<2x32xf32>, vector<32x32xf32>, vector<2x32xf32> -> vector<2x32xf32>
    %58 = arith.addf %56, %57 : vector<2x32xf32>
    %59 = arith.addf %58, %20 : vector<2x32xf32>
    %60 = math.tanh %59 : vector<2x32xf32>
    %61 = vector.extract_strided_slice %18 {offsets = [8, 0], sizes = [2, 32], strides = [1, 1]} : vector<16x32xf32> to vector<2x32xf32>
    %cst_30 = arith.constant dense<0.000000e+00> : vector<2x32xf32>
    %62 = tpu.matmul %55, %3, %cst_30 {dimension_numbers = #tpu.dot_dimension_numbers<[1], [0], [0], [1], [0, 0, 1, 1], [], []>} : vector<2x32xf32>, vector<32x32xf32>, vector<2x32xf32> -> vector<2x32xf32>
    %63 = arith.addf %61, %62 : vector<2x32xf32>
    %64 = math.tanh %63 : vector<2x32xf32>
    %cst_31 = arith.constant dense<0.000000e+00> : vector<2x32xf32>
    %65 = tpu.matmul %64, %5, %cst_31 {dimension_numbers = #tpu.dot_dimension_numbers<[1], [0], [0], [1], [0, 0, 1, 1], [], []>} : vector<2x32xf32>, vector<32x32xf32>, vector<2x32xf32> -> vector<2x32xf32>
    %cst_32 = arith.constant dense<0.000000e+00> : vector<2x32xf32>
    %66 = tpu.matmul %60, %7, %cst_32 {dimension_numbers = #tpu.dot_dimension_numbers<[1], [0], [0], [1], [0, 0, 1, 1], [], []>} : vector<2x32xf32>, vector<32x32xf32>, vector<2x32xf32> -> vector<2x32xf32>
    %67 = arith.addf %65, %66 : vector<2x32xf32>
    %68 = arith.addf %67, %20 : vector<2x32xf32>
    %69 = math.tanh %68 : vector<2x32xf32>
    %70 = vector.extract_strided_slice %18 {offsets = [10, 0], sizes = [2, 32], strides = [1, 1]} : vector<16x32xf32> to vector<2x32xf32>
    %cst_33 = arith.constant dense<0.000000e+00> : vector<2x32xf32>
    %71 = tpu.matmul %64, %3, %cst_33 {dimension_numbers = #tpu.dot_dimension_numbers<[1], [0], [0], [1], [0, 0, 1, 1], [], []>} : vector<2x32xf32>, vector<32x32xf32>, vector<2x32xf32> -> vector<2x32xf32>
    %72 = arith.addf %70, %71 : vector<2x32xf32>
    %73 = math.tanh %72 : vector<2x32xf32>
    %cst_34 = arith.constant dense<0.000000e+00> : vector<2x32xf32>
    %74 = tpu.matmul %73, %5, %cst_34 {dimension_numbers = #tpu.dot_dimension_numbers<[1], [0], [0], [1], [0, 0, 1, 1], [], []>} : vector<2x32xf32>, vector<32x32xf32>, vector<2x32xf32> -> vector<2x32xf32>
    %cst_35 = arith.constant dense<0.000000e+00> : vector<2x32xf32>
    %75 = tpu.matmul %69, %7, %cst_35 {dimension_numbers = #tpu.dot_dimension_numbers<[1], [0], [0], [1], [0, 0, 1, 1], [], []>} : vector<2x32xf32>, vector<32x32xf32>, vector<2x32xf32> -> vector<2x32xf32>
    %76 = arith.addf %74, %75 : vector<2x32xf32>
    %77 = arith.addf %76, %20 : vector<2x32xf32>
    %78 = math.tanh %77 : vector<2x32xf32>
    %79 = vector.extract_strided_slice %18 {offsets = [12, 0], sizes = [2, 32], strides = [1, 1]} : vector<16x32xf32> to vector<2x32xf32>
    %cst_36 = arith.constant dense<0.000000e+00> : vector<2x32xf32>
    %80 = tpu.matmul %73, %3, %cst_36 {dimension_numbers = #tpu.dot_dimension_numbers<[1], [0], [0], [1], [0, 0, 1, 1], [], []>} : vector<2x32xf32>, vector<32x32xf32>, vector<2x32xf32> -> vector<2x32xf32>
    %81 = arith.addf %79, %80 : vector<2x32xf32>
    %82 = math.tanh %81 : vector<2x32xf32>
    %cst_37 = arith.constant dense<0.000000e+00> : vector<2x32xf32>
    %83 = tpu.matmul %82, %5, %cst_37 {dimension_numbers = #tpu.dot_dimension_numbers<[1], [0], [0], [1], [0, 0, 1, 1], [], []>} : vector<2x32xf32>, vector<32x32xf32>, vector<2x32xf32> -> vector<2x32xf32>
    %cst_38 = arith.constant dense<0.000000e+00> : vector<2x32xf32>
    %84 = tpu.matmul %78, %7, %cst_38 {dimension_numbers = #tpu.dot_dimension_numbers<[1], [0], [0], [1], [0, 0, 1, 1], [], []>} : vector<2x32xf32>, vector<32x32xf32>, vector<2x32xf32> -> vector<2x32xf32>
    %85 = arith.addf %83, %84 : vector<2x32xf32>
    %86 = arith.addf %85, %20 : vector<2x32xf32>
    %87 = math.tanh %86 : vector<2x32xf32>
    %88 = vector.extract_strided_slice %18 {offsets = [14, 0], sizes = [2, 32], strides = [1, 1]} : vector<16x32xf32> to vector<2x32xf32>
    %cst_39 = arith.constant dense<0.000000e+00> : vector<2x32xf32>
    %89 = tpu.matmul %82, %3, %cst_39 {dimension_numbers = #tpu.dot_dimension_numbers<[1], [0], [0], [1], [0, 0, 1, 1], [], []>} : vector<2x32xf32>, vector<32x32xf32>, vector<2x32xf32> -> vector<2x32xf32>
    %90 = arith.addf %88, %89 : vector<2x32xf32>
    %91 = math.tanh %90 : vector<2x32xf32>
    %cst_40 = arith.constant dense<0.000000e+00> : vector<2x32xf32>
    %92 = tpu.matmul %91, %5, %cst_40 {dimension_numbers = #tpu.dot_dimension_numbers<[1], [0], [0], [1], [0, 0, 1, 1], [], []>} : vector<2x32xf32>, vector<32x32xf32>, vector<2x32xf32> -> vector<2x32xf32>
    %cst_41 = arith.constant dense<0.000000e+00> : vector<2x32xf32>
    %93 = tpu.matmul %87, %7, %cst_41 {dimension_numbers = #tpu.dot_dimension_numbers<[1], [0], [0], [1], [0, 0, 1, 1], [], []>} : vector<2x32xf32>, vector<32x32xf32>, vector<2x32xf32> -> vector<2x32xf32>
    %94 = arith.addf %92, %93 : vector<2x32xf32>
    %95 = arith.addf %94, %20 : vector<2x32xf32>
    %96 = math.tanh %95 : vector<2x32xf32>
    %c0_42 = arith.constant 0 : index
    %c0_43 = arith.constant 0 : index
    %c0_44 = arith.constant 0 : index
    %97 = vector.load %arg6[%c0_42, %c0_43, %c0_44] : memref<2x2x32xf32, #tpu.memory_space<vmem>>, vector<1x2x32xf32>
    %98 = vector.shape_cast %97 : vector<1x2x32xf32> to vector<2x32xf32>
    %99 = vector.shape_cast %91 : vector<2x32xf32> to vector<1x2x32xf32>
    tpu.vector_store %arg6[%c0_42, %c0_43, %c0_44], %99 {strides = array<i32>} : memref<2x2x32xf32, #tpu.memory_space<vmem>>, vector<1x2x32xf32>,
    %c1_45 = arith.constant 1 : index
    %c0_46 = arith.constant 0 : index
    %c0_47 = arith.constant 0 : index
    %100 = vector.load %arg6[%c1_45, %c0_46, %c0_47] : memref<2x2x32xf32, #tpu.memory_space<vmem>>, vector<1x2x32xf32>
    %101 = vector.shape_cast %100 : vector<1x2x32xf32> to vector<2x32xf32>
    %102 = vector.shape_cast %96 : vector<2x32xf32> to vector<1x2x32xf32>
    tpu.vector_store %arg6[%c1_45, %c0_46, %c0_47], %102 {strides = array<i32>} : memref<2x2x32xf32, #tpu.memory_space<vmem>>, vector<1x2x32xf32>,
    %103 = tpu.concatenate %33, %42, %51, %60, %69, %78, %87, %96 in 0 : vector<2x32xf32>, vector<2x32xf32>, vector<2x32xf32>, vector<2x32xf32>, vector<2x32xf32>, vector<2x32xf32>, vector<2x32xf32>, vector<2x32xf32> -> vector<16x32xf32>
    %cst_48 = arith.constant dense<0.000000e+00> : vector<16x128xf32>
    %104 = tpu.matmul %103, %9, %cst_48 {dimension_numbers = #tpu.dot_dimension_numbers<[1], [0], [0], [1], [0, 0, 1, 1], [], []>} : vector<16x32xf32>, vector<32x128xf32>, vector<16x128xf32> -> vector<16x128xf32>
    %105 = vector.broadcast %10 : vector<1x128xf32> to vector<16x128xf32>
    %106 = arith.addf %104, %105 : vector<16x128xf32>
    %cst_49 = arith.constant 0.000000e+00 : f32
    %107 = vector.broadcast %cst_49 : f32 to vector<16x128xf32>
    %108 = arith.maximumf %106, %107 : vector<16x128xf32>
    %109 = vector.broadcast %11 : vector<1x128xf32> to vector<16x128xf32>
    %110 = arith.mulf %108, %109 : vector<16x128xf32>
    %cst_50 = arith.constant dense<0.000000e+00> : vector<16xf32>
    %111 = vector.multi_reduction <add>, %110, %cst_50 [1] : vector<16x128xf32> to vector<16xf32>
    %112 = vector.shape_cast %111 : vector<16xf32> to vector<16x1xf32>
    %113 = vector.broadcast %14 : vector<1x1xf32> to vector<16x1xf32>
    %114 = arith.addf %112, %113 : vector<16x1xf32>
    %c0_51 = arith.constant 0 : index
    %c0_52 = arith.constant 0 : index
    %115 = vector.load %arg5[%c0_51, %c0_52] : memref<16x1xf32, #tpu.memory_space<vmem>>, vector<16x1xf32>
    tpu.vector_store %arg5[%c0_51, %c0_52], %114 {strides = array<i32>} : memref<16x1xf32, #tpu.memory_space<vmem>>, vector<16x1xf32>,
    return
  }
  func.func @transform_0(%arg0: i32) -> (i32, i32) {
    %c0_i32 = arith.constant 0 : i32
    %c0_i32_0 = arith.constant 0 : i32
    %c0_i32_1 = arith.constant 0 : i32
    return %c0_i32, %c0_i32_0 : i32, i32
  }
  func.func @transform_1(%arg0: i32) -> (i32, i32, i32) {
    %c0_i32 = arith.constant 0 : i32
    %c0_i32_0 = arith.constant 0 : i32
    %c0_i32_1 = arith.constant 0 : i32
    %c0_i32_2 = arith.constant 0 : i32
    return %c0_i32, %c0_i32_0, %c0_i32_1 : i32, i32, i32
  }
  func.func @transform_2(%arg0: i32) -> (i32, i32, i32) {
    %c0_i32 = arith.constant 0 : i32
    %c0_i32_0 = arith.constant 0 : i32
    %c0_i32_1 = arith.constant 0 : i32
    %c0_i32_2 = arith.constant 0 : i32
    return %c0_i32, %c0_i32_0, %c0_i32_1 : i32, i32, i32
  }
  func.func @transform_3(%arg0: i32) -> (i32, i32) {
    %c0_i32 = arith.constant 0 : i32
    %c0_i32_0 = arith.constant 0 : i32
    %c0_i32_1 = arith.constant 0 : i32
    return %c0_i32, %c0_i32_0 : i32, i32
  }
  func.func @transform_4(%arg0: i32) -> (i32, i32) {
    %c0_i32 = arith.constant 0 : i32
    %c0_i32_0 = arith.constant 0 : i32
    %c0_i32_1 = arith.constant 0 : i32
    return %c0_i32, %c0_i32_0 : i32, i32
  }
  func.func @transform_5(%arg0: i32) -> (i32, i32, i32) {
    %c0_i32 = arith.constant 0 : i32
    %c0_i32_0 = arith.constant 0 : i32
    %c0_i32_1 = arith.constant 0 : i32
    %c0_i32_2 = arith.constant 0 : i32
    return %c0_i32, %c0_i32_0, %c0_i32_1 : i32, i32, i32
  }
}

</mosaic_0001>

<llo_original>
// kernel: rnn_forward.1
$region0: #{rnn_forward.1}
  #allocation0 [shape = 'u32[]', space=smem, size = 0x4, offset = 0x4, fixed_abs, tag = 'smem constant byte address 0x4 - core index']
  #allocation1 [shape = 'u32[72,128]{1,0:T(1,128)}', space=vmem, size = 0x9000, scoped, tag = 'internal scratch']
  %s0 = inlined_call_operand.vmem [shape: f32[16,32], index: 0, kind: input, shape index: {}]
  %s1 = inlined_call_operand.vmem [shape: f32[2,2,32], index: 1, kind: input, shape index: {}]
  %s2 = inlined_call_operand.hbm [shape: f32[4,32,32], index: 2, kind: input, shape index: {}]
  %s3 = inlined_call_operand.vmem [shape: f32[37,128], index: 3, kind: input, shape index: {}]
  %s4 = inlined_call_operand.vmem [shape: f32[16,1], index: 4, kind: output, shape index: {0}]
  %s5 = inlined_call_operand.hbm [shape: f32[2,2,32], index: 5, kind: output, shape index: {1}]
  %6 = xla_tuple %s4, %s5
  %s7 = sld [smem:[#allocation0]]
  $region38: #{rnn_forward.1} parent=0
    _
  %s9 = ssub.s32 1, %s7
  %s10 = scalar_select 0, %s9, %s7
  $region1: #{rnn_forward.1} parent=0
    #allocation2 [shape = 'u8[65536]{0}', space=vmem, size = 0x10000, scoped, tag = 'input window, operand 2, single buffered']
    #allocation3 [shape = 's32[1]{0}', space=sflag, size = 0x4, scoped, tag = 'scoped memory for rnn_forward.1']
    #allocation4 [shape = 's32[1]{0}', space=sflag, size = 0x4, scoped, tag = 'scoped memory for rnn_forward.1']
    #allocation5 [shape = 'u8[2048]{0}', space=vmem, size = 0x800, scoped, tag = 'output window, operand 1, single buffered']
    %11 = vsyncpa [#allocation3], 0
    %12 = vsyncpa [#allocation4], 0
    // Predicated region
    $region2: #{rnn_forward.1} parent=1 // pred_check
      _
    $region3: #{rnn_forward.1} parent=1 // pred_check_branch
      %14 = sbr.rel (0) target = $region5
    $region4: #{rnn_forward.1} parent=1 // pred_region
      _
    $region5: #{rnn_forward.1} parent=1 // pred_fallthru
      _
    // Predicated region
    $region6: #{rnn_forward.1} parent=1 // pred_check
      _
    $region7: #{rnn_forward.1} parent=1 // pred_check_branch
      %16 = sbr.rel (0) target = $region9
    $region8: #{rnn_forward.1} parent=1 // pred_region
      _
    $region9: #{rnn_forward.1} parent=1 // pred_fallthru
      _
    // Predicated region
    $region10: #{rnn_forward.1} parent=1 // pred_check
      _
    $region11: #{rnn_forward.1} parent=1 // pred_check_branch
      %18 = sbr.rel (0) target = $region13
    $region12: #{rnn_forward.1} parent=1 // pred_region
      %20 = vsyncadd [#allocation3], 0
      %s21 = sshll.u32 %s2, 4
      %s22 = int_to_ptr.hbm [resolvable:$true] %s21
      %s23 = sshll.u32 [#allocation2], 4
      %s24 = int_to_ptr.vmem [resolvable:$true] %s23
      %29 = dma.hbm_to_vmem [thread:$0]  %s22, 2048, %s24, [#allocation3], 128, 128, 8
    $region13: #{rnn_forward.1} parent=1 // pred_fallthru
      _
    // Predicated region
    $region14: #{rnn_forward.1} parent=1 // pred_check
      _
    $region15: #{rnn_forward.1} parent=1 // pred_check_branch
      %31 = sbr.rel (0) target = $region17
    $region16: #{rnn_forward.1} parent=1 // pred_region
      _
    $region17: #{rnn_forward.1} parent=1 // pred_fallthru
      _
    // Predicated region
    $region18: #{rnn_forward.1} parent=1 // pred_check
      _
    $region19: #{rnn_forward.1} parent=1 // pred_check_branch
      %33 = sbr.rel (0) target = $region21
    $region20: #{rnn_forward.1} parent=1 // pred_region
      %35 = dma.done [#allocation3], 2048
    $region21: #{rnn_forward.1} parent=1 // pred_fallthru
      _
    %v36 = vld [vmem:[#allocation2] sm:$0xff]
    %v37 = vld [vmem:[#allocation2 + $0x8] sm:$0xff]
    %v38 = vld [vmem:[#allocation2 + $0x10] sm:$0xff]
    %v39 = vld [vmem:[#allocation2 + $0x18] sm:$0xff]
    %s40 = scalar_lea.vmem [#allocation2], 32
    %v41 = vld [vmem:[%s40] sm:$0xff]
    %v42 = vld [vmem:[%s40 + $0x8] sm:$0xff]
    %v43 = vld [vmem:[%s40 + $0x10] sm:$0xff]
    %v44 = vld [vmem:[%s40 + $0x18] sm:$0xff]
    %s45 = scalar_lea.vmem [#allocation2], 64
    %v46 = vld [vmem:[%s45] sm:$0xff]
    %v47 = vld [vmem:[%s45 + $0x8] sm:$0xff]
    %v48 = vld [vmem:[%s45 + $0x10] sm:$0xff]
    %v49 = vld [vmem:[%s45 + $0x18] sm:$0xff]
    %s50 = scalar_lea.vmem [#allocation2], 96
    %v51 = vld [vmem:[%s50] sm:$0xff]
    %v52 = vld [vmem:[%s50 + $0x8] sm:$0xff]
    %v53 = vld [vmem:[%s50 + $0x10] sm:$0xff]
    %v54 = vld [vmem:[%s50 + $0x18] sm:$0xff]
    %v55 = vld [vmem:[%s3] sm:$0xff]
    %v56 = vld [vmem:[%s3 + $0x8] sm:$0xff]
    %v57 = vld [vmem:[%s3 + $0x10] sm:$0xff]
    %v58 = vld [vmem:[%s3 + $0x18] sm:$0xff]
    %v59 = vld [vmem:[%s3 + $0x20] sm:$0x1f]
    %v60 = vld [vmem:[%s0] sm:$0xff]
    %v61 = vld [vmem:[%s0 + $0x8] sm:$0xff]
    %v62 = vperm.slane %v59, 2
    %vm63 = vcmask 261120
    %v65 = vsel %vm63, %v60, 0
    %v68 = vsel %vm63, %v61, 0
    %70 = vmatpush.msra.mxu0 0.0
    %71 = vmatpush.msra.mxu0 0.0
    %72 = vmatpush.msra.mxu0 0.0
    %73 = vmatpush.msra.mxu0 0.0
    %74 = vmatpush.msra.mxu0 0.0
    %75 = vmatpush.msra.mxu0 0.0
    %76 = vmatpush.msra.mxu0 0.0
    %77 = vmatpush.msra.mxu0 0.0
    %78 = vmatpush.msra.mxu0 0.0
    %79 = vmatpush.msra.mxu0 0.0
    %80 = vmatpush.msra.mxu0 0.0
    %81 = vmatpush.msra.mxu0 0.0
    %82 = vmatpush.msra.mxu0 %v39
    %83 = vmatpush.msra.mxu0 %v38
    %84 = vmatpush.msra.mxu0 %v37
    %85 = vmatpush.msra.mxu0 %v36
    %86 = vmatmul.f32.gmra.mxu0 %v65
    %v87 = vpop.f32.mrf.mxu0
    %v88 = vadd.f32 %v62, %v87
    %89 = vmatmul.f32.gmra.mxu0 %v68
    %v90 = vpop.f32.mrf.mxu0
    %v91 = vadd.f32 %v62, %v90
    %92 = vdwg.mxu0
    %v93 = vperm.slane %v59, 3
    %v94 = vld [vmem:[%s1] sm:$0x3]
    %s95 = scalar_lea.vmem %s1, 2
    %v96 = vld [vmem:[%s95] sm:$0x3]
    %v98 = vsel %vm63, %v94, 0
    %100 = vmatpush.msra.mxu0 0.0
    %101 = vmatpush.msra.mxu0 0.0
    %102 = vmatpush.msra.mxu0 0.0
    %103 = vmatpush.msra.mxu0 0.0
    %104 = vmatpush.msra.mxu0 0.0
    %105 = vmatpush.msra.mxu0 0.0
    %106 = vmatpush.msra.mxu0 0.0
    %107 = vmatpush.msra.mxu0 0.0
    %108 = vmatpush.msra.mxu0 0.0
    %109 = vmatpush.msra.mxu0 0.0
    %110 = vmatpush.msra.mxu0 0.0
    %111 = vmatpush.msra.mxu0 0.0
    %112 = vmatpush.msra.mxu0 %v44
    %113 = vmatpush.msra.mxu0 %v43
    %114 = vmatpush.msra.mxu0 %v42
    %115 = vmatpush.msra.mxu0 %v41
    %116 = vmatmul.f32.gmra.mxu0 %v98
    %v117 = vpop.f32.mrf.mxu0
    %v118 = vadd.f32 0.0, %v117
    %119 = vdwg.mxu0
    %v120 = vadd.f32 %v88, %v118
    %v121 = vtanh.pop %v120
    %v123 = vsel %vm63, %v96, 0
    %125 = vmatpush.msra.mxu0 0.0
    %126 = vmatpush.msra.mxu0 0.0
    %127 = vmatpush.msra.mxu0 0.0
    %128 = vmatpush.msra.mxu0 0.0
    %129 = vmatpush.msra.mxu0 0.0
    %130 = vmatpush.msra.mxu0 0.0
    %131 = vmatpush.msra.mxu0 0.0
    %132 = vmatpush.msra.mxu0 0.0
    %133 = vmatpush.msra.mxu0 0.0
    %134 = vmatpush.msra.mxu0 0.0
    %135 = vmatpush.msra.mxu0 0.0
    %136 = vmatpush.msra.mxu0 0.0
    %137 = vmatpush.msra.mxu0 %v54
    %138 = vmatpush.msra.mxu0 %v53
    %139 = vmatpush.msra.mxu0 %v52
    %140 = vmatpush.msra.mxu0 %v51
    %141 = vmatmul.f32.gmra.mxu0 %v123
    %v142 = vpop.f32.mrf.mxu0
    %v143 = vadd.f32 0.0, %v142
    %144 = vdwg.mxu0
    %v146 = vsel %vm63, %v121, 0
    %148 = vmatpush.msra.mxu0 0.0
    %149 = vmatpush.msra.mxu0 0.0
    %150 = vmatpush.msra.mxu0 0.0
    %151 = vmatpush.msra.mxu0 0.0
    %152 = vmatpush.msra.mxu0 0.0
    %153 = vmatpush.msra.mxu0 0.0
    %154 = vmatpush.msra.mxu0 0.0
    %155 = vmatpush.msra.mxu0 0.0
    %156 = vmatpush.msra.mxu0 0.0
    %157 = vmatpush.msra.mxu0 0.0
    %158 = vmatpush.msra.mxu0 0.0
    %159 = vmatpush.msra.mxu0 0.0
    %160 = vmatpush.msra.mxu0 %v49
    %161 = vmatpush.msra.mxu0 %v48
    %162 = vmatpush.msra.mxu0 %v47
    %163 = vmatpush.msra.mxu0 %v46
    %164 = vmatmul.f32.gmra.mxu0 %v146
    %v165 = vpop.f32.mrf.mxu0
    %v166 = vadd.f32 %v143, %v165
    %167 = vdwg.mxu0
    %v168 = vadd.f32 %v166, %v93
    %v169 = vtanh.pop %v168
    %170 = vmatpush.msra.mxu0 0.0
    %171 = vmatpush.msra.mxu0 0.0
    %172 = vmatpush.msra.mxu0 0.0
    %173 = vmatpush.msra.mxu0 0.0
    %174 = vmatpush.msra.mxu0 0.0
    %175 = vmatpush.msra.mxu0 0.0
    %176 = vmatpush.msra.mxu0 0.0
    %177 = vmatpush.msra.mxu0 0.0
    %178 = vmatpush.msra.mxu0 0.0
    %179 = vmatpush.msra.mxu0 0.0
    %180 = vmatpush.msra.mxu0 0.0
    %181 = vmatpush.msra.mxu0 0.0
    %182 = vmatpush.msra.mxu0 %v44
    %183 = vmatpush.msra.mxu0 %v43
    %184 = vmatpush.msra.mxu0 %v42
    %185 = vmatpush.msra.mxu0 %v41
    %186 = vmatmul.f32.gmra.mxu0 %v146
    %v187 = vpop.f32.mrf.mxu0
    %v188 = vadd.f32 0.0, %v187
    %189 = vdwg.mxu0
    %v191 = vrot.slane %v188, 6
    %v193 = vadd.f32 %v88, %v191
    %v194 = vtanh.pop %v193
    %v196 = vsel %vm63, %v169, 0
    %198 = vmatpush.msra.mxu0 0.0
    %199 = vmatpush.msra.mxu0 0.0
    %200 = vmatpush.msra.mxu0 0.0
    %201 = vmatpush.msra.mxu0 0.0
    %202 = vmatpush.msra.mxu0 0.0
    %203 = vmatpush.msra.mxu0 0.0
    %204 = vmatpush.msra.mxu0 0.0
    %205 = vmatpush.msra.mxu0 0.0
    %206 = vmatpush.msra.mxu0 0.0
    %207 = vmatpush.msra.mxu0 0.0
    %208 = vmatpush.msra.mxu0 0.0
    %209 = vmatpush.msra.mxu0 0.0
    %210 = vmatpush.msra.mxu0 %v54
    %211 = vmatpush.msra.mxu0 %v53
    %212 = vmatpush.msra.mxu0 %v52
    %213 = vmatpush.msra.mxu0 %v51
    %214 = vmatmul.f32.gmra.mxu0 %v196
    %v215 = vpop.f32.mrf.mxu0
    %v216 = vadd.f32 0.0, %v215
    %217 = vdwg.mxu0
    %v219 = vrot.slane %v194, 2
    %v220 = vsel %vm63, %v219, 0
    %222 = vmatpush.msra.mxu0 0.0
    %223 = vmatpush.msra.mxu0 0.0
    %224 = vmatpush.msra.mxu0 0.0
    %225 = vmatpush.msra.mxu0 0.0
    %226 = vmatpush.msra.mxu0 0.0
    %227 = vmatpush.msra.mxu0 0.0
    %228 = vmatpush.msra.mxu0 0.0
    %229 = vmatpush.msra.mxu0 0.0
    %230 = vmatpush.msra.mxu0 0.0
    %231 = vmatpush.msra.mxu0 0.0
    %232 = vmatpush.msra.mxu0 0.0
    %233 = vmatpush.msra.mxu0 0.0
    %234 = vmatpush.msra.mxu0 %v49
    %235 = vmatpush.msra.mxu0 %v48
    %236 = vmatpush.msra.mxu0 %v47
    %237 = vmatpush.msra.mxu0 %v46
    %238 = vmatmul.f32.gmra.mxu0 %v220
    %v239 = vpop.f32.mrf.mxu0
    %v240 = vadd.f32 %v216, %v239
    %241 = vdwg.mxu0
    %v242 = vadd.f32 %v240, %v93
    %v243 = vtanh.pop %v242
    %244 = vmatpush.msra.mxu0 0.0
    %245 = vmatpush.msra.mxu0 0.0
    %246 = vmatpush.msra.mxu0 0.0
    %247 = vmatpush.msra.mxu0 0.0
    %248 = vmatpush.msra.mxu0 0.0
    %249 = vmatpush.msra.mxu0 0.0
    %250 = vmatpush.msra.mxu0 0.0
    %251 = vmatpush.msra.mxu0 0.0
    %252 = vmatpush.msra.mxu0 0.0
    %253 = vmatpush.msra.mxu0 0.0
    %254 = vmatpush.msra.mxu0 0.0
    %255 = vmatpush.msra.mxu0 0.0
    %256 = vmatpush.msra.mxu0 %v44
    %257 = vmatpush.msra.mxu0 %v43
    %258 = vmatpush.msra.mxu0 %v42
    %259 = vmatpush.msra.mxu0 %v41
    %260 = vmatmul.f32.gmra.mxu0 %v220
    %v261 = vpop.f32.mrf.mxu0
    %v262 = vadd.f32 0.0, %v261
    %263 = vdwg.mxu0
    %v265 = vrot.slane %v262, 4
    %v267 = vadd.f32 %v88, %v265
    %v268 = vtanh.pop %v267
    %v270 = vsel %vm63, %v243, 0
    %272 = vmatpush.msra.mxu0 0.0
    %273 = vmatpush.msra.mxu0 0.0
    %274 = vmatpush.msra.mxu0 0.0
    %275 = vmatpush.msra.mxu0 0.0
    %276 = vmatpush.msra.mxu0 0.0
    %277 = vmatpush.msra.mxu0 0.0
    %278 = vmatpush.msra.mxu0 0.0
    %279 = vmatpush.msra.mxu0 0.0
    %280 = vmatpush.msra.mxu0 0.0
    %281 = vmatpush.msra.mxu0 0.0
    %282 = vmatpush.msra.mxu0 0.0
    %283 = vmatpush.msra.mxu0 0.0
    %284 = vmatpush.msra.mxu0 %v54
    %285 = vmatpush.msra.mxu0 %v53
    %286 = vmatpush.msra.mxu0 %v52
    %287 = vmatpush.msra.mxu0 %v51
    %288 = vmatmul.f32.gmra.mxu0 %v270
    %v289 = vpop.f32.mrf.mxu0
    %v290 = vadd.f32 0.0, %v289
    %291 = vdwg.mxu0
    %v293 = vrot.slane %v268, 4
    %v294 = vsel %vm63, %v293, 0
    %296 = vmatpush.msra.mxu0 0.0
    %297 = vmatpush.msra.mxu0 0.0
    %298 = vmatpush.msra.mxu0 0.0
    %299 = vmatpush.msra.mxu0 0.0
    %300 = vmatpush.msra.mxu0 0.0
    %301 = vmatpush.msra.mxu0 0.0
    %302 = vmatpush.msra.mxu0 0.0
    %303 = vmatpush.msra.mxu0 0.0
    %304 = vmatpush.msra.mxu0 0.0
    %305 = vmatpush.msra.mxu0 0.0
    %306 = vmatpush.msra.mxu0 0.0
    %307 = vmatpush.msra.mxu0 0.0
    %308 = vmatpush.msra.mxu0 %v49
    %309 = vmatpush.msra.mxu0 %v48
    %310 = vmatpush.msra.mxu0 %v47
    %311 = vmatpush.msra.mxu0 %v46
    %312 = vmatmul.f32.gmra.mxu0 %v294
    %v313 = vpop.f32.mrf.mxu0
    %v314 = vadd.f32 %v290, %v313
    %315 = vdwg.mxu0
    %v316 = vadd.f32 %v314, %v93
    %v317 = vtanh.pop %v316
    %318 = vmatpush.msra.mxu0 0.0
    %319 = vmatpush.msra.mxu0 0.0
    %320 = vmatpush.msra.mxu0 0.0
    %321 = vmatpush.msra.mxu0 0.0
    %322 = vmatpush.msra.mxu0 0.0
    %323 = vmatpush.msra.mxu0 0.0
    %324 = vmatpush.msra.mxu0 0.0
    %325 = vmatpush.msra.mxu0 0.0
    %326 = vmatpush.msra.mxu0 0.0
    %327 = vmatpush.msra.mxu0 0.0
    %328 = vmatpush.msra.mxu0 0.0
    %329 = vmatpush.msra.mxu0 0.0
    %330 = vmatpush.msra.mxu0 %v44
    %331 = vmatpush.msra.mxu0 %v43
    %332 = vmatpush.msra.mxu0 %v42
    %333 = vmatpush.msra.mxu0 %v41
    %334 = vmatmul.f32.gmra.mxu0 %v294
    %v335 = vpop.f32.mrf.mxu0
    %v336 = vadd.f32 0.0, %v335
    %337 = vdwg.mxu0
    %v339 = vrot.slane %v336, 2
    %v341 = vadd.f32 %v88, %v339
    %v342 = vtanh.pop %v341
    %v344 = vsel %vm63, %v317, 0
    %346 = vmatpush.msra.mxu0 0.0
    %347 = vmatpush.msra.mxu0 0.0
    %348 = vmatpush.msra.mxu0 0.0
    %349 = vmatpush.msra.mxu0 0.0
    %350 = vmatpush.msra.mxu0 0.0
    %351 = vmatpush.msra.mxu0 0.0
    %352 = vmatpush.msra.mxu0 0.0
    %353 = vmatpush.msra.mxu0 0.0
    %354 = vmatpush.msra.mxu0 0.0
    %355 = vmatpush.msra.mxu0 0.0
    %356 = vmatpush.msra.mxu0 0.0
    %357 = vmatpush.msra.mxu0 0.0
    %358 = vmatpush.msra.mxu0 %v54
    %359 = vmatpush.msra.mxu0 %v53
    %360 = vmatpush.msra.mxu0 %v52
    %361 = vmatpush.msra.mxu0 %v51
    %362 = vmatmul.f32.gmra.mxu0 %v344
    %v363 = vpop.f32.mrf.mxu0
    %v364 = vadd.f32 0.0, %v363
    %365 = vdwg.mxu0
    %v367 = vrot.slane %v342, 6
    %v368 = vsel %vm63, %v367, 0
    %370 = vmatpush.msra.mxu0 0.0
    %371 = vmatpush.msra.mxu0 0.0
    %372 = vmatpush.msra.mxu0 0.0
    %373 = vmatpush.msra.mxu0 0.0
    %374 = vmatpush.msra.mxu0 0.0
    %375 = vmatpush.msra.mxu0 0.0
    %376 = vmatpush.msra.mxu0 0.0
    %377 = vmatpush.msra.mxu0 0.0
    %378 = vmatpush.msra.mxu0 0.0
    %379 = vmatpush.msra.mxu0 0.0
    %380 = vmatpush.msra.mxu0 0.0
    %381 = vmatpush.msra.mxu0 0.0
    %382 = vmatpush.msra.mxu0 %v49
    %383 = vmatpush.msra.mxu0 %v48
    %384 = vmatpush.msra.mxu0 %v47
    %385 = vmatpush.msra.mxu0 %v46
    %386 = vmatmul.f32.gmra.mxu0 %v368
    %v387 = vpop.f32.mrf.mxu0
    %v388 = vadd.f32 %v364, %v387
    %389 = vdwg.mxu0
    %v390 = vadd.f32 %v388, %v93
    %v391 = vtanh.pop %v390
    %392 = vmatpush.msra.mxu0 0.0
    %393 = vmatpush.msra.mxu0 0.0
    %394 = vmatpush.msra.mxu0 0.0
    %395 = vmatpush.msra.mxu0 0.0
    %396 = vmatpush.msra.mxu0 0.0
    %397 = vmatpush.msra.mxu0 0.0
    %398 = vmatpush.msra.mxu0 0.0
    %399 = vmatpush.msra.mxu0 0.0
    %400 = vmatpush.msra.mxu0 0.0
    %401 = vmatpush.msra.mxu0 0.0
    %402 = vmatpush.msra.mxu0 0.0
    %403 = vmatpush.msra.mxu0 0.0
    %404 = vmatpush.msra.mxu0 %v44
    %405 = vmatpush.msra.mxu0 %v43
    %406 = vmatpush.msra.mxu0 %v42
    %407 = vmatpush.msra.mxu0 %v41
    %408 = vmatmul.f32.gmra.mxu0 %v368
    %v409 = vpop.f32.mrf.mxu0
    %v410 = vadd.f32 0.0, %v409
    %411 = vdwg.mxu0
    %v412 = vadd.f32 %v91, %v410
    %v413 = vtanh.pop %v412
    %v415 = vsel %vm63, %v391, 0
    %417 = vmatpush.msra.mxu0 0.0
    %418 = vmatpush.msra.mxu0 0.0
    %419 = vmatpush.msra.mxu0 0.0
    %420 = vmatpush.msra.mxu0 0.0
    %421 = vmatpush.msra.mxu0 0.0
    %422 = vmatpush.msra.mxu0 0.0
    %423 = vmatpush.msra.mxu0 0.0
    %424 = vmatpush.msra.mxu0 0.0
    %425 = vmatpush.msra.mxu0 0.0
    %426 = vmatpush.msra.mxu0 0.0
    %427 = vmatpush.msra.mxu0 0.0
    %428 = vmatpush.msra.mxu0 0.0
    %429 = vmatpush.msra.mxu0 %v54
    %430 = vmatpush.msra.mxu0 %v53
    %431 = vmatpush.msra.mxu0 %v52
    %432 = vmatpush.msra.mxu0 %v51
    %433 = vmatmul.f32.gmra.mxu0 %v415
    %v434 = vpop.f32.mrf.mxu0
    %v435 = vadd.f32 0.0, %v434
    %436 = vdwg.mxu0
    %v438 = vsel %vm63, %v413, 0
    %440 = vmatpush.msra.mxu0 0.0
    %441 = vmatpush.msra.mxu0 0.0
    %442 = vmatpush.msra.mxu0 0.0
    %443 = vmatpush.msra.mxu0 0.0
    %444 = vmatpush.msra.mxu0 0.0
    %445 = vmatpush.msra.mxu0 0.0
    %446 = vmatpush.msra.mxu0 0.0
    %447 = vmatpush.msra.mxu0 0.0
    %448 = vmatpush.msra.mxu0 0.0
    %449 = vmatpush.msra.mxu0 0.0
    %450 = vmatpush.msra.mxu0 0.0
    %451 = vmatpush.msra.mxu0 0.0
    %452 = vmatpush.msra.mxu0 %v49
    %453 = vmatpush.msra.mxu0 %v48
    %454 = vmatpush.msra.mxu0 %v47
    %455 = vmatpush.msra.mxu0 %v46
    %456 = vmatmul.f32.gmra.mxu0 %v438
    %v457 = vpop.f32.mrf.mxu0
    %v458 = vadd.f32 %v435, %v457
    %459 = vdwg.mxu0
    %v460 = vadd.f32 %v458, %v93
    %v461 = vtanh.pop %v460
    %462 = vmatpush.msra.mxu0 0.0
    %463 = vmatpush.msra.mxu0 0.0
    %464 = vmatpush.msra.mxu0 0.0
    %465 = vmatpush.msra.mxu0 0.0
    %466 = vmatpush.msra.mxu0 0.0
    %467 = vmatpush.msra.mxu0 0.0
    %468 = vmatpush.msra.mxu0 0.0
    %469 = vmatpush.msra.mxu0 0.0
    %470 = vmatpush.msra.mxu0 0.0
    %471 = vmatpush.msra.mxu0 0.0
    %472 = vmatpush.msra.mxu0 0.0
    %473 = vmatpush.msra.mxu0 0.0
    %474 = vmatpush.msra.mxu0 %v44
    %475 = vmatpush.msra.mxu0 %v43
    %476 = vmatpush.msra.mxu0 %v42
    %477 = vmatpush.msra.mxu0 %v41
    %478 = vmatmul.f32.gmra.mxu0 %v438
    %v479 = vpop.f32.mrf.mxu0
    %v480 = vadd.f32 0.0, %v479
    %481 = vdwg.mxu0
    %v483 = vrot.slane %v480, 6
    %v485 = vadd.f32 %v91, %v483
    %v486 = vtanh.pop %v485
    %v488 = vsel %vm63, %v461, 0
    %490 = vmatpush.msra.mxu0 0.0
    %491 = vmatpush.msra.mxu0 0.0
    %492 = vmatpush.msra.mxu0 0.0
    %493 = vmatpush.msra.mxu0 0.0
    %494 = vmatpush.msra.mxu0 0.0
    %495 = vmatpush.msra.mxu0 0.0
    %496 = vmatpush.msra.mxu0 0.0
    %497 = vmatpush.msra.mxu0 0.0
    %498 = vmatpush.msra.mxu0 0.0
    %499 = vmatpush.msra.mxu0 0.0
    %500 = vmatpush.msra.mxu0 0.0
    %501 = vmatpush.msra.mxu0 0.0
    %502 = vmatpush.msra.mxu0 %v54
    %503 = vmatpush.msra.mxu0 %v53
    %504 = vmatpush.msra.mxu0 %v52
    %505 = vmatpush.msra.mxu0 %v51
    %506 = vmatmul.f32.gmra.mxu0 %v488
    %v507 = vpop.f32.mrf.mxu0
    %v508 = vadd.f32 0.0, %v507
    %509 = vdwg.mxu0
    %v511 = vrot.slane %v486, 2
    %v512 = vsel %vm63, %v511, 0
    %514 = vmatpush.msra.mxu0 0.0
    %515 = vmatpush.msra.mxu0 0.0
    %516 = vmatpush.msra.mxu0 0.0
    %517 = vmatpush.msra.mxu0 0.0
    %518 = vmatpush.msra.mxu0 0.0
    %519 = vmatpush.msra.mxu0 0.0
    %520 = vmatpush.msra.mxu0 0.0
    %521 = vmatpush.msra.mxu0 0.0
    %522 = vmatpush.msra.mxu0 0.0
    %523 = vmatpush.msra.mxu0 0.0
    %524 = vmatpush.msra.mxu0 0.0
    %525 = vmatpush.msra.mxu0 0.0
    %526 = vmatpush.msra.mxu0 %v49
    %527 = vmatpush.msra.mxu0 %v48
    %528 = vmatpush.msra.mxu0 %v47
    %529 = vmatpush.msra.mxu0 %v46
    %530 = vmatmul.f32.gmra.mxu0 %v512
    %v531 = vpop.f32.mrf.mxu0
    %v532 = vadd.f32 %v508, %v531
    %533 = vdwg.mxu0
    %v534 = vadd.f32 %v532, %v93
    %v535 = vtanh.pop %v534
    %536 = vmatpush.msra.mxu0 0.0
    %537 = vmatpush.msra.mxu0 0.0
    %538 = vmatpush.msra.mxu0 0.0
    %539 = vmatpush.msra.mxu0 0.0
    %540 = vmatpush.msra.mxu0 0.0
    %541 = vmatpush.msra.mxu0 0.0
    %542 = vmatpush.msra.mxu0 0.0
    %543 = vmatpush.msra.mxu0 0.0
    %544 = vmatpush.msra.mxu0 0.0
    %545 = vmatpush.msra.mxu0 0.0
    %546 = vmatpush.msra.mxu0 0.0
    %547 = vmatpush.msra.mxu0 0.0
    %548 = vmatpush.msra.mxu0 %v44
    %549 = vmatpush.msra.mxu0 %v43
    %550 = vmatpush.msra.mxu0 %v42
    %551 = vmatpush.msra.mxu0 %v41
    %552 = vmatmul.f32.gmra.mxu0 %v512
    %v553 = vpop.f32.mrf.mxu0
    %v554 = vadd.f32 0.0, %v553
    %555 = vdwg.mxu0
    %v557 = vrot.slane %v554, 4
    %v559 = vadd.f32 %v91, %v557
    %v560 = vtanh.pop %v559
    %v562 = vsel %vm63, %v535, 0
    %564 = vmatpush.msra.mxu0 0.0
    %565 = vmatpush.msra.mxu0 0.0
    %566 = vmatpush.msra.mxu0 0.0
    %567 = vmatpush.msra.mxu0 0.0
    %568 = vmatpush.msra.mxu0 0.0
    %569 = vmatpush.msra.mxu0 0.0
    %570 = vmatpush.msra.mxu0 0.0
    %571 = vmatpush.msra.mxu0 0.0
    %572 = vmatpush.msra.mxu0 0.0
    %573 = vmatpush.msra.mxu0 0.0
    %574 = vmatpush.msra.mxu0 0.0
    %575 = vmatpush.msra.mxu0 0.0
    %576 = vmatpush.msra.mxu0 %v54
    %577 = vmatpush.msra.mxu0 %v53
    %578 = vmatpush.msra.mxu0 %v52
    %579 = vmatpush.msra.mxu0 %v51
    %580 = vmatmul.f32.gmra.mxu0 %v562
    %v581 = vpop.f32.mrf.mxu0
    %v582 = vadd.f32 0.0, %v581
    %583 = vdwg.mxu0
    %v585 = vrot.slane %v560, 4
    %v586 = vsel %vm63, %v585, 0
    %588 = vmatpush.msra.mxu0 0.0
    %589 = vmatpush.msra.mxu0 0.0
    %590 = vmatpush.msra.mxu0 0.0
    %591 = vmatpush.msra.mxu0 0.0
    %592 = vmatpush.msra.mxu0 0.0
    %593 = vmatpush.msra.mxu0 0.0
    %594 = vmatpush.msra.mxu0 0.0
    %595 = vmatpush.msra.mxu0 0.0
    %596 = vmatpush.msra.mxu0 0.0
    %597 = vmatpush.msra.mxu0 0.0
    %598 = vmatpush.msra.mxu0 0.0
    %599 = vmatpush.msra.mxu0 0.0
    %600 = vmatpush.msra.mxu0 %v49
    %601 = vmatpush.msra.mxu0 %v48
    %602 = vmatpush.msra.mxu0 %v47
    %603 = vmatpush.msra.mxu0 %v46
    %604 = vmatmul.f32.gmra.mxu0 %v586
    %v605 = vpop.f32.mrf.mxu0
    %v606 = vadd.f32 %v582, %v605
    %607 = vdwg.mxu0
    %v608 = vadd.f32 %v606, %v93
    %v609 = vtanh.pop %v608
    %610 = vmatpush.msra.mxu0 0.0
    %611 = vmatpush.msra.mxu0 0.0
    %612 = vmatpush.msra.mxu0 0.0
    %613 = vmatpush.msra.mxu0 0.0
    %614 = vmatpush.msra.mxu0 0.0
    %615 = vmatpush.msra.mxu0 0.0
    %616 = vmatpush.msra.mxu0 0.0
    %617 = vmatpush.msra.mxu0 0.0
    %618 = vmatpush.msra.mxu0 0.0
    %619 = vmatpush.msra.mxu0 0.0
    %620 = vmatpush.msra.mxu0 0.0
    %621 = vmatpush.msra.mxu0 0.0
    %622 = vmatpush.msra.mxu0 %v44
    %623 = vmatpush.msra.mxu0 %v43
    %624 = vmatpush.msra.mxu0 %v42
    %625 = vmatpush.msra.mxu0 %v41
    %626 = vmatmul.f32.gmra.mxu0 %v586
    %v627 = vpop.f32.mrf.mxu0
    %v628 = vadd.f32 0.0, %v627
    %629 = vdwg.mxu0
    %v631 = vrot.slane %v628, 2
    %v633 = vadd.f32 %v91, %v631
    %v634 = vtanh.pop %v633
    %v636 = vsel %vm63, %v609, 0
    %638 = vmatpush.msra.mxu0 0.0
    %639 = vmatpush.msra.mxu0 0.0
    %640 = vmatpush.msra.mxu0 0.0
    %641 = vmatpush.msra.mxu0 0.0
    %642 = vmatpush.msra.mxu0 0.0
    %643 = vmatpush.msra.mxu0 0.0
    %644 = vmatpush.msra.mxu0 0.0
    %645 = vmatpush.msra.mxu0 0.0
    %646 = vmatpush.msra.mxu0 0.0
    %647 = vmatpush.msra.mxu0 0.0
    %648 = vmatpush.msra.mxu0 0.0
    %649 = vmatpush.msra.mxu0 0.0
    %650 = vmatpush.msra.mxu0 %v54
    %651 = vmatpush.msra.mxu0 %v53
    %652 = vmatpush.msra.mxu0 %v52
    %653 = vmatpush.msra.mxu0 %v51
    %654 = vmatmul.f32.gmra.mxu0 %v636
    %v655 = vpop.f32.mrf.mxu0
    %v656 = vadd.f32 0.0, %v655
    %657 = vdwg.mxu0
    %v659 = vrot.slane %v634, 6
    %v660 = vsel %vm63, %v659, 0
    %662 = vmatpush.msra.mxu0 0.0
    %663 = vmatpush.msra.mxu0 0.0
    %664 = vmatpush.msra.mxu0 0.0
    %665 = vmatpush.msra.mxu0 0.0
    %666 = vmatpush.msra.mxu0 0.0
    %667 = vmatpush.msra.mxu0 0.0
    %668 = vmatpush.msra.mxu0 0.0
    %669 = vmatpush.msra.mxu0 0.0
    %670 = vmatpush.msra.mxu0 0.0
    %671 = vmatpush.msra.mxu0 0.0
    %672 = vmatpush.msra.mxu0 0.0
    %673 = vmatpush.msra.mxu0 0.0
    %674 = vmatpush.msra.mxu0 %v49
    %675 = vmatpush.msra.mxu0 %v48
    %676 = vmatpush.msra.mxu0 %v47
    %677 = vmatpush.msra.mxu0 %v46
    %678 = vmatmul.f32.gmra.mxu0 %v660
    %v679 = vpop.f32.mrf.mxu0
    %v680 = vadd.f32 %v656, %v679
    %681 = vdwg.mxu0
    %v682 = vadd.f32 %v680, %v93
    %v683 = vtanh.pop %v682
    %vm684 = vcmask 261126
    %685 = vst.msk [vmem:[#allocation5 - $0x6] sm:$0xc0] %vm684, %v634
    %s686 = scalar_lea.vmem [#allocation5], 2
    %vm687 = vcmask 254976
    %688 = vst.msk [vmem:[%s686] sm:$0x3] %vm687, %v683
    %v689 = vrot.slane %v243, 6
    %v691 = vrot.slane %v317, 4
    %v693 = vrot.slane %v391, 2
    %v695 = vrot.slane %v535, 6
    %v697 = vrot.slane %v609, 4
    %v700 = vrot.slane %v683, 2
    %vm702 = vcmask 1041408
    %v703 = vsel %vm702, %v169, %v689
    %vm704 = vcmask 1043456
    %v705 = vsel %vm704, %v703, %v691
    %vm706 = vcmask 1045504
    %v707 = vsel %vm706, %v705, %v693
    %v708 = vsel %vm702, %v461, %v695
    %v709 = vsel %vm704, %v708, %v697
    %v710 = vsel %vm706, %v709, %v700
    %v711 = vperm.slane %v59, 0
    %v713 = vsel %vm63, %v707, 0
    %v716 = vsel %vm63, %v710, 0
    %718 = vmatpush.msra.mxu0 0.0
    %719 = vmatpush.msra.mxu0 0.0
    %720 = vmatpush.msra.mxu0 0.0
    %721 = vmatpush.msra.mxu0 0.0
    %722 = vmatpush.msra.mxu0 0.0
    %723 = vmatpush.msra.mxu0 0.0
    %724 = vmatpush.msra.mxu0 0.0
    %725 = vmatpush.msra.mxu0 0.0
    %726 = vmatpush.msra.mxu0 0.0
    %727 = vmatpush.msra.mxu0 0.0
    %728 = vmatpush.msra.mxu0 0.0
    %729 = vmatpush.msra.mxu0 0.0
    %730 = vmatpush.msra.mxu0 %v58
    %731 = vmatpush.msra.mxu0 %v57
    %732 = vmatpush.msra.mxu0 %v56
    %733 = vmatpush.msra.mxu0 %v55
    %734 = vmatmul.f32.gmra.mxu0 %v713
    %v735 = vpop.f32.mrf.mxu0
    %v736 = vadd.f32 %v711, %v735
    %737 = vmatmul.f32.gmra.mxu0 %v716
    %v738 = vpop.f32.mrf.mxu0
    %v739 = vadd.f32 %v711, %v738
    %740 = vdwg.mxu0
    %v741 = vmax.f32 %v736, 0.0
    %v742 = vmax.f32 %v739, 0.0
    %v743 = vperm.slane %v59, 1
    %v744 = vmul.f32 %v741, %v743
    %v745 = vmul.f32 %v742, %v743
    %746 = vadd.xlane.f32.xlu0 %v744
    %v747 = vpop.xlane.xlu0 %746
    %748 = vadd.xlane.f32.xlu0 %v745
    %v749 = vpop.xlane.xlu0 %748
    %v750 = vperm.slane %v59, 4
    %v751 = vadd.f32 %v747, %v750
    %v752 = vadd.f32 %v749, %v750
    %vm753 = vcmask 7168
    %754 = vst.msk [vmem:[%s4] sm:$0xff] %vm753, %v751
    %755 = vst.msk [vmem:[%s4 + $0x8] sm:$0xff] %vm753, %v752
    // Predicated region
    $region22: #{rnn_forward.1} parent=1 // pred_check
      _
    $region23: #{rnn_forward.1} parent=1 // pred_check_branch
      %757 = sbr.rel (0) target = $region25
    $region24: #{rnn_forward.1} parent=1 // pred_region
      _
    $region25: #{rnn_forward.1} parent=1 // pred_fallthru
      _
    // Predicated region
    $region26: #{rnn_forward.1} parent=1 // pred_check
      _
    $region27: #{rnn_forward.1} parent=1 // pred_check_branch
      %759 = sbr.rel (0) target = $region29
    $region28: #{rnn_forward.1} parent=1 // pred_region
      %761 = vsyncadd [#allocation4], 0
      %s762 = sshll.u32 [#allocation5], 4
      %s763 = int_to_ptr.vmem [resolvable:$true] %s762
      %s764 = sshll.u32 %s5, 4
      %s765 = int_to_ptr.hbm [resolvable:$true] %s764
      %770 = dma.vmem_to_hbm [thread:$0]  %s763, 64, %s765, [#allocation4], 32, 32, 2
    $region29: #{rnn_forward.1} parent=1 // pred_fallthru
      _
    // Predicated region
    $region30: #{rnn_forward.1} parent=1 // pred_check
      _
    $region31: #{rnn_forward.1} parent=1 // pred_check_branch
      %772 = sbr.rel (0) target = $region33
    $region32: #{rnn_forward.1} parent=1 // pred_region
      _
    $region33: #{rnn_forward.1} parent=1 // pred_fallthru
      _
    // Predicated region
    $region34: #{rnn_forward.1} parent=1 // pred_check
      _
    $region35: #{rnn_forward.1} parent=1 // pred_check_branch
      %774 = sbr.rel (0) target = $region37
    $region36: #{rnn_forward.1} parent=1 // pred_region
      %776 = dma.done [#allocation4], 64
    $region37: #{rnn_forward.1} parent=1 // pred_fallthru
      _
    %777 = vsyncpa [#allocation3], 1
    %778 = vsyncpa [#allocation4], 1

</llo_original>
